<compile_context>
chip_gen: v5e
topology: v5e:2x2
jax: 0.10.0
libtpu: 0.0.40
codegen_flags: <defaults>
</compile_context>

<pallas_src>
import functools

import jax
import jax.numpy as jnp
import numpy as np
from jax.experimental import pallas as pl
from jax.experimental.pallas import tpu as pltpu


def _nearest_idx(out_size, in_size):
    # PyTorch mode='nearest': src = floor(dst * in / out)
    return (np.arange(out_size) * in_size) // out_size


@functools.lru_cache(maxsize=64)
def _depth_segments(Din, Dout):
    """For each input depth: the contiguous run [start, start+count) of output depths it feeds."""
    idx_d = _nearest_idx(Dout, Din)                      # non-decreasing
    counts = np.bincount(idx_d, minlength=Din)
    starts = np.concatenate([[0], np.cumsum(counts)[:-1]])
    return tuple(int(s) for s in starts), tuple(int(c) for c in counts)


@functools.lru_cache(maxsize=64)
def _hw_selection(Hin, Win, Hout, Wout, dtype_name):
    """Combined H x W Kronecker one-hot gather matrix (hw_in, hw_out), cached on device."""
    idx_h = _nearest_idx(Hout, Hin)
    idx_w = _nearest_idx(Wout, Win)
    src_flat = (idx_h[:, None] * Win + idx_w[None, :]).reshape(-1)   # (Hout*Wout,)
    shw = np.zeros((Hin * Win, Hout * Wout), dtype=np.float32)
    shw[src_flat, np.arange(Hout * Wout)] = 1.0
    return jnp.asarray(shw, dtype=jnp.dtype(dtype_name))


@functools.lru_cache(maxsize=1)
def _vmem_budget():
    """(data-tile budget, scoped vmem limit) derived from this chip's physical VMEM."""
    try:
        cap = int(pltpu.get_tpu_info().vmem_capacity_bytes)
    except Exception:
        cap = 64 * 1024 * 1024                 # conservative fallback (v7x per-TC)
    tile_budget = int(cap * 0.42)              # ~27 MiB on v7x, ~54 MiB on v5e/v6e
    vmem_limit = int(cap * 0.75)               # ~48 MiB on v7x, ~96 MiB on v5e/v6e
    return tile_budget, vmem_limit


def _choose_nc_block(NC, Din, Dout, hw_in, hw_out, itemsize, tile_budget):
    """Largest divisor of NC whose buffers fit the budget, keeping >=2 grid steps (megacore)."""
    def tile_bytes(bnc):
        b = 2 * bnc * Din * hw_in * itemsize       # input block, double-buffered
        b += 2 * bnc * Dout * hw_out * itemsize    # output block, double-buffered
        b += hw_in * hw_out * itemsize             # shw: single resident copy
        b += bnc * Din * hw_out * itemsize         # y scratch
        return b

    cap = NC if NC < 2 else max(1, NC // 2)        # keep >=2 parallel steps when possible
    best = 1                                       # Bnc=1 is the graceful minimum fallback
    for bnc in range(1, cap + 1):
        if NC % bnc == 0 and tile_bytes(bnc) <= tile_budget:
            best = bnc
    return best


def _make_kernel(Bnc, Din, hw_in, hw_out, seg_starts, seg_counts, acc_dtype, depth_identity):
    def kernel(x_ref, shw_ref, o_ref, y_scr):
        # x_ref  : (Bnc, Din, hw_in)     Bnc (n,c) volumes, H*W flattened on lanes
        # shw_ref: (hw_in, hw_out)       grid-invariant one-hot HW gather, resident in VMEM
        # o_ref  : (Bnc, Dout, hw_out)   lane-dense output slab
        # y_scr  : (Bnc, Din, hw_out)    HW-upsampled rows before depth duplication
        x = x_ref[...].reshape(Bnc * Din, hw_in)                       # fatten MXU M-dim
        y = jnp.dot(x, shw_ref[...], preferred_element_type=acc_dtype)  # (Bnc*Din, hw_out)
        y = y.reshape(Bnc, Din, hw_out).astype(o_ref.dtype)

        if depth_identity:
            o_ref[...] = y
        else:
            y_scr[...] = y
            # Depth gather == static row duplication: idx_d is known at trace time and is
            # non-decreasing, so each input depth feeds one contiguous run of output depths.
            for di in range(Din):
                c = seg_counts[di]
                if c == 0:
                    continue
                s = seg_starts[di]
                o_ref[:, s:s + c, :] = jnp.broadcast_to(
                    y_scr[:, di:di + 1, :], (Bnc, c, hw_out))
    return kernel


def upsampling_nearest(encoder_features, x):
    """Nearest-neighbor 3D upsampling of x (NCDHW) to encoder_features' spatial size.

    Equivalent to F.interpolate(x, size=encoder_features.shape[2:], mode='nearest').
    Floating-point inputs only (one-hot gather goes through the MXU).
    """
    N, C, Din, Hin, Win = x.shape
    Dout, Hout, Wout = encoder_features.shape[2:]
    NC = N * C
    hw_in, hw_out = Hin * Win, Hout * Wout
    itemsize = jnp.dtype(x.dtype).itemsize

    shw = _hw_selection(Hin, Win, Hout, Wout, jnp.dtype(x.dtype).name)
    seg_starts, seg_counts = _depth_segments(Din, Dout)

    tile_budget, vmem_limit = _vmem_budget()
    Bnc = _choose_nc_block(NC, Din, Dout, hw_in, hw_out, itemsize, tile_budget)

    # bf16 stays bf16 (one-hot selection is exact); otherwise accumulate in f32.
    acc_dtype = jnp.bfloat16 if jnp.dtype(x.dtype) == jnp.bfloat16 else jnp.float32
    kernel = _make_kernel(Bnc, Din, hw_in, hw_out, seg_starts, seg_counts,
                          acc_dtype, depth_identity=(Din == Dout))

    x_flat = x.reshape(NC, Din, hw_in)
    grid = (pl.cdiv(NC, Bnc),)

    # pure data movement: advertise as memory-bound
    bytes_accessed = (x.size + NC * Dout * hw_out + shw.size) * itemsize
    flops = 2 * NC * Din * hw_in * hw_out      # single one-hot selection matmul per (n, c)

    out = pl.pallas_call(
        kernel,
        out_shape=jax.ShapeDtypeStruct((NC, Dout, hw_out), x.dtype),
        grid_spec=pltpu.PrefetchScalarGridSpec(
            num_scalar_prefetch=0,
            grid=grid,
            in_specs=[
                pl.BlockSpec((Bnc, Din, hw_in), lambda b: (b, 0, 0)),
                # grid-invariant selection matrix: whole array resident in VMEM
                # (single copy; no per-step re-fetch or double buffering).
                pl.BlockSpec(memory_space=pltpu.MemorySpace.VMEM),
            ],
            out_specs=pl.BlockSpec((Bnc, Dout, hw_out), lambda b: (b, 0, 0)),
            scratch_shapes=[pltpu.VMEM((Bnc, Din, hw_out), x.dtype)],
        ),
        compiler_params=pltpu.CompilerParams(
            dimension_semantics=("parallel",),
            vmem_limit_bytes=vmem_limit,
        ),
        cost_estimate=pl.CostEstimate(
            flops=int(flops), transcendentals=0, bytes_accessed=int(bytes_accessed)),
    )(x_flat, shw)

    return out.reshape(N, C, Dout, Hout, Wout)


if __name__ == "__main__":
    key = jax.random.PRNGKey(0)
    k1, k2 = jax.random.split(key)

    # x: (N, C, D, H, W); encoder features only provide the output spatial size.
    x = jax.random.normal(k1, (2, 4, 8, 8, 8), dtype=jnp.float32)
    encoder_features = jax.random.normal(k2, (2, 4, 16, 16, 16), dtype=jnp.float32)

    out = upsampling_nearest(encoder_features, x)
    out = jax.block_until_ready(out)
    assert out.shape == (2, 4, 16, 16, 16)

    # reference 1: exact 2x nearest upsample == repeat along each spatial dim
    ref = jnp.repeat(jnp.repeat(jnp.repeat(x, 2, axis=2), 2, axis=3), 2, axis=4)
    np.testing.assert_allclose(np.asarray(out), np.asarray(ref), rtol=1e-6, atol=1e-6)

    # reference 2: non-uniform target size, numpy gather with PyTorch 'nearest' indices
    enc2 = jnp.zeros((2, 4, 12, 20, 16), dtype=jnp.float32)
    out2 = jax.block_until_ready(upsampling_nearest(enc2, x))
    xn = np.asarray(x)
    id_d, id_h, id_w = _nearest_idx(12, 8), _nearest_idx(20, 8), _nearest_idx(16, 8)
    ref2 = xn[:, :, id_d][:, :, :, id_h][:, :, :, :, id_w]
    np.testing.assert_allclose(np.asarray(out2), ref2, rtol=1e-6, atol=1e-6)

    print("KERNEL_OK")
</pallas_src>

<mosaic_0001>
module attributes {stable_mosaic.version = 11 : i64} {
  func.func @kernel(%arg0: i32, %arg1: memref<4x8x64xf32, #tpu.memory_space<vmem>>, %arg2: memref<64x256xf32, #tpu.memory_space<vmem>>, %arg3: memref<4x16x256xf32, #tpu.memory_space<vmem>>, %arg4: memref<4x8x256xf32, #tpu.memory_space<vmem>>) attributes {dimension_semantics = [#tpu.dimension_semantics<parallel>], iteration_bounds = array<i64: 2>, scalar_prefetch = 0 : i64, scratch_operands = 1 : i64, tpu.core_type = #tpu.core_type<tc>, window_params = [{transform_indices = @transform_0, window_bounds = array<i64: 4, 8, 64>}, {pipeline_mode = #tpu.pipeline_mode<synchronous>, transform_indices = @transform_1, window_bounds = array<i64: 64, 256>}, {transform_indices = @transform_2, window_bounds = array<i64: 4, 16, 256>}]} {
    %c0 = arith.constant 0 : index
    %c0_0 = arith.constant 0 : index
    %c0_1 = arith.constant 0 : index
    %0 = vector.load %arg1[%c0, %c0_0, %c0_1] : memref<4x8x64xf32, #tpu.memory_space<vmem>>, vector<4x8x64xf32>
    %1 = vector.shape_cast %0 : vector<4x8x64xf32> to vector<32x64xf32>
    %c0_2 = arith.constant 0 : index
    %c0_3 = arith.constant 0 : index
    %2 = vector.load %arg2[%c0_2, %c0_3] : memref<64x256xf32, #tpu.memory_space<vmem>>, vector<64x256xf32>
    %cst = arith.constant dense<0.000000e+00> : vector<32x256xf32>
    %3 = tpu.matmul %1, %2, %cst {dimension_numbers = #tpu.dot_dimension_numbers<[1], [0], [0], [1], [0, 0, 1, 1], [], []>} : vector<32x64xf32>, vector<64x256xf32>, vector<32x256xf32> -> vector<32x256xf32>
    %4 = vector.shape_cast %3 : vector<32x256xf32> to vector<4x8x256xf32>
    %c0_4 = arith.constant 0 : index
    %c0_5 = arith.constant 0 : index
    %c0_6 = arith.constant 0 : index
    %5 = vector.load %arg4[%c0_4, %c0_5, %c0_6] : memref<4x8x256xf32, #tpu.memory_space<vmem>>, vector<4x8x256xf32>
    tpu.vector_store %arg4[%c0_4, %c0_5, %c0_6], %4 {strides = array<i32>} : memref<4x8x256xf32, #tpu.memory_space<vmem>>, vector<4x8x256xf32>,
    %c0_7 = arith.constant 0 : index
    %c0_8 = arith.constant 0 : index
    %c0_9 = arith.constant 0 : index
    %6 = vector.load %arg4[%c0_7, %c0_8, %c0_9] : memref<4x8x256xf32, #tpu.memory_space<vmem>>, vector<4x1x256xf32>
    %7 = vector.shape_cast %6 : vector<4x1x256xf32> to vector<4x1x256xf32>
    %8 = vector.broadcast %7 : vector<4x1x256xf32> to vector<4x2x256xf32>
    %c0_10 = arith.constant 0 : index
    %c0_11 = arith.constant 0 : index
    %c0_12 = arith.constant 0 : index
    %9 = vector.load %arg3[%c0_10, %c0_11, %c0_12] : memref<4x16x256xf32, #tpu.memory_space<vmem>>, vector<4x2x256xf32>
    tpu.vector_store %arg3[%c0_10, %c0_11, %c0_12], %8 {strides = array<i32>} : memref<4x16x256xf32, #tpu.memory_space<vmem>>, vector<4x2x256xf32>,
    %c0_13 = arith.constant 0 : index
    %c1 = arith.constant 1 : index
    %c0_14 = arith.constant 0 : index
    %10 = vector.load %arg4[%c0_13, %c1, %c0_14] : memref<4x8x256xf32, #tpu.memory_space<vmem>>, vector<4x1x256xf32>
    %11 = vector.shape_cast %10 : vector<4x1x256xf32> to vector<4x1x256xf32>
    %12 = vector.broadcast %11 : vector<4x1x256xf32> to vector<4x2x256xf32>
    %c0_15 = arith.constant 0 : index
    %c2 = arith.constant 2 : index
    %c0_16 = arith.constant 0 : index
    %13 = vector.load %arg3[%c0_15, %c2, %c0_16] : memref<4x16x256xf32, #tpu.memory_space<vmem>>, vector<4x2x256xf32>
    tpu.vector_store %arg3[%c0_15, %c2, %c0_16], %12 {strides = array<i32>} : memref<4x16x256xf32, #tpu.memory_space<vmem>>, vector<4x2x256xf32>,
    %c0_17 = arith.constant 0 : index
    %c2_18 = arith.constant 2 : index
    %c0_19 = arith.constant 0 : index
    %14 = vector.load %arg4[%c0_17, %c2_18, %c0_19] : memref<4x8x256xf32, #tpu.memory_space<vmem>>, vector<4x1x256xf32>
    %15 = vector.shape_cast %14 : vector<4x1x256xf32> to vector<4x1x256xf32>
    %16 = vector.broadcast %15 : vector<4x1x256xf32> to vector<4x2x256xf32>
    %c0_20 = arith.constant 0 : index
    %c4 = arith.constant 4 : index
    %c0_21 = arith.constant 0 : index
    %17 = vector.load %arg3[%c0_20, %c4, %c0_21] : memref<4x16x256xf32, #tpu.memory_space<vmem>>, vector<4x2x256xf32>
    tpu.vector_store %arg3[%c0_20, %c4, %c0_21], %16 {strides = array<i32>} : memref<4x16x256xf32, #tpu.memory_space<vmem>>, vector<4x2x256xf32>,
    %c0_22 = arith.constant 0 : index
    %c3 = arith.constant 3 : index
    %c0_23 = arith.constant 0 : index
    %18 = vector.load %arg4[%c0_22, %c3, %c0_23] : memref<4x8x256xf32, #tpu.memory_space<vmem>>, vector<4x1x256xf32>
    %19 = vector.shape_cast %18 : vector<4x1x256xf32> to vector<4x1x256xf32>
    %20 = vector.broadcast %19 : vector<4x1x256xf32> to vector<4x2x256xf32>
    %c0_24 = arith.constant 0 : index
    %c6 = arith.constant 6 : index
    %c0_25 = arith.constant 0 : index
    %21 = vector.load %arg3[%c0_24, %c6, %c0_25] : memref<4x16x256xf32, #tpu.memory_space<vmem>>, vector<4x2x256xf32>
    tpu.vector_store %arg3[%c0_24, %c6, %c0_25], %20 {strides = array<i32>} : memref<4x16x256xf32, #tpu.memory_space<vmem>>, vector<4x2x256xf32>,
    %c0_26 = arith.constant 0 : index
    %c4_27 = arith.constant 4 : index
    %c0_28 = arith.constant 0 : index
    %22 = vector.load %arg4[%c0_26, %c4_27, %c0_28] : memref<4x8x256xf32, #tpu.memory_space<vmem>>, vector<4x1x256xf32>
    %23 = vector.shape_cast %22 : vector<4x1x256xf32> to vector<4x1x256xf32>
    %24 = vector.broadcast %23 : vector<4x1x256xf32> to vector<4x2x256xf32>
    %c0_29 = arith.constant 0 : index
    %c8 = arith.constant 8 : index
    %c0_30 = arith.constant 0 : index
    %25 = vector.load %arg3[%c0_29, %c8, %c0_30] : memref<4x16x256xf32, #tpu.memory_space<vmem>>, vector<4x2x256xf32>
    tpu.vector_store %arg3[%c0_29, %c8, %c0_30], %24 {strides = array<i32>} : memref<4x16x256xf32, #tpu.memory_space<vmem>>, vector<4x2x256xf32>,
    %c0_31 = arith.constant 0 : index
    %c5 = arith.constant 5 : index
    %c0_32 = arith.constant 0 : index
    %26 = vector.load %arg4[%c0_31, %c5, %c0_32] : memref<4x8x256xf32, #tpu.memory_space<vmem>>, vector<4x1x256xf32>
    %27 = vector.shape_cast %26 : vector<4x1x256xf32> to vector<4x1x256xf32>
    %28 = vector.broadcast %27 : vector<4x1x256xf32> to vector<4x2x256xf32>
    %c0_33 = arith.constant 0 : index
    %c10 = arith.constant 10 : index
    %c0_34 = arith.constant 0 : index
    %29 = vector.load %arg3[%c0_33, %c10, %c0_34] : memref<4x16x256xf32, #tpu.memory_space<vmem>>, vector<4x2x256xf32>
    tpu.vector_store %arg3[%c0_33, %c10, %c0_34], %28 {strides = array<i32>} : memref<4x16x256xf32, #tpu.memory_space<vmem>>, vector<4x2x256xf32>,
    %c0_35 = arith.constant 0 : index
    %c6_36 = arith.constant 6 : index
    %c0_37 = arith.constant 0 : index
    %30 = vector.load %arg4[%c0_35, %c6_36, %c0_37] : memref<4x8x256xf32, #tpu.memory_space<vmem>>, vector<4x1x256xf32>
    %31 = vector.shape_cast %30 : vector<4x1x256xf32> to vector<4x1x256xf32>
    %32 = vector.broadcast %31 : vector<4x1x256xf32> to vector<4x2x256xf32>
    %c0_38 = arith.constant 0 : index
    %c12 = arith.constant 12 : index
    %c0_39 = arith.constant 0 : index
    %33 = vector.load %arg3[%c0_38, %c12, %c0_39] : memref<4x16x256xf32, #tpu.memory_space<vmem>>, vector<4x2x256xf32>
    tpu.vector_store %arg3[%c0_38, %c12, %c0_39], %32 {strides = array<i32>} : memref<4x16x256xf32, #tpu.memory_space<vmem>>, vector<4x2x256xf32>,
    %c0_40 = arith.constant 0 : index
    %c7 = arith.constant 7 : index
    %c0_41 = arith.constant 0 : index
    %34 = vector.load %arg4[%c0_40, %c7, %c0_41] : memref<4x8x256xf32, #tpu.memory_space<vmem>>, vector<4x1x256xf32>
    %35 = vector.shape_cast %34 : vector<4x1x256xf32> to vector<4x1x256xf32>
    %36 = vector.broadcast %35 : vector<4x1x256xf32> to vector<4x2x256xf32>
    %c0_42 = arith.constant 0 : index
    %c14 = arith.constant 14 : index
    %c0_43 = arith.constant 0 : index
    %37 = vector.load %arg3[%c0_42, %c14, %c0_43] : memref<4x16x256xf32, #tpu.memory_space<vmem>>, vector<4x2x256xf32>
    tpu.vector_store %arg3[%c0_42, %c14, %c0_43], %36 {strides = array<i32>} : memref<4x16x256xf32, #tpu.memory_space<vmem>>, vector<4x2x256xf32>,
    return
  }
  func.func @transform_0(%arg0: i32) -> (i32, i32, i32) {
    %c0_i32 = arith.constant 0 : i32
    %c0_i32_0 = arith.constant 0 : i32
    %c0_i32_1 = arith.constant 0 : i32
    return %arg0, %c0_i32, %c0_i32_0 : i32, i32, i32
  }
  func.func @transform_1(%arg0: i32) -> (i32, i32) {
    %c0_i32 = arith.constant 0 : i32
    %c0_i32_0 = arith.constant 0 : i32
    %c0_i32_1 = arith.constant 0 : i32
    return %c0_i32, %c0_i32_0 : i32, i32
  }
  func.func @transform_2(%arg0: i32) -> (i32, i32, i32) {
    %c0_i32 = arith.constant 0 : i32
    %c0_i32_0 = arith.constant 0 : i32
    %c0_i32_1 = arith.constant 0 : i32
    return %arg0, %c0_i32, %c0_i32_0 : i32, i32, i32
  }
}

</mosaic_0001>

<llo_original>
// kernel: tpu_custom_call.1
$region0: #{tpu_custom_call.1}
  #allocation0 [shape = 'u32[]', space=smem, size = 0x4, offset = 0x4, fixed_abs, tag = 'smem constant byte address 0x4 - core index']
  #allocation1 [shape = 'u32[72,128]{1,0:T(1,128)}', space=vmem, size = 0x9000, scoped, tag = 'internal scratch']
  #allocation2 [shape = 'f32[4,8,256]{2,1,0:T(8,128)}', space=vmem, size = 0x8000, scoped, tag = 'scratch operand']
  %s0 = inlined_call_operand.hbm [shape: f32[8,8,64], index: 0, kind: input, shape index: {}]
  %s1 = inlined_call_operand.hbm [shape: f32[64,256], index: 1, kind: input, shape index: {}]
  %s2 = inlined_call_operand.hbm [shape: f32[8,16,256], index: 2, kind: output, shape index: {}]
  %s3 = sld [smem:[#allocation0]]
  $region49: #{tpu_custom_call.1} parent=0
    _
  %s5 = ssub.s32 1, %s3
  %s6 = scalar_select 0, %s5, %s3
  $region1: #{tpu_custom_call.1} parent=0
    #allocation3 [shape = 'u8[32768]{0}', space=vmem, size = 0x8000, scoped, tag = 'input window, operand 0']
    #allocation4 [shape = 's32[2]{0}', space=sflag, size = 0x8, scoped, tag = 'scoped memory for tpu_custom_call.1']
    #allocation5 [shape = 's32[2]{0}', space=sflag, size = 0x8, scoped, tag = 'scoped memory for tpu_custom_call.1']
    #allocation6 [shape = 'u8[65536]{0}', space=vmem, size = 0x10000, scoped, tag = 'input window, operand 1, single buffered']
    #allocation7 [shape = 's32[1]{0}', space=sflag, size = 0x4, scoped, tag = 'scoped memory for tpu_custom_call.1']
    #allocation8 [shape = 'u8[131072]{0}', space=vmem, size = 0x20000, scoped, tag = 'output window, operand 0']
    %7 = vsyncpa [#allocation4], 0
    %s8 = scalar_lea.sflag [#allocation4], 1
    %9 = vsyncpa %s8, 0
    %10 = vsyncpa [#allocation7], 0
    %11 = vsyncpa [#allocation5], 0
    %s12 = scalar_lea.sflag [#allocation5], 1
    %13 = vsyncpa %s12, 0
    loop: start=0, step=1, limit=4
    $region2: #{tpu_custom_call.1} parent=1 // loop_pre_header
      _
    $region3: #{tpu_custom_call.1} parent=1 // loop_header
      %s15 = sphi 0, %s19
      %p16 = scmp.ge.s32.totalorder %s15, 4
      %s25 = sphi 0, %s27
      %s28 = sphi 0, %s25
      %s29 = sphi 0, %s28
      %s45 = sphi 0, %s29
      %s49 = sphi 0, %s49
      %s51 = sphi 0, %s49
      %s52 = sphi 0, %s51
      %s66 = sphi 0, %s52
      %s72 = sphi 0, %s74
      %s75 = sphi 0, %s72
      %s76 = sphi 0, %s75
      %s92 = sphi 0, %s76
    $region4: #{tpu_custom_call.1} parent=1 // loop_header_branch
      %18 = sbr.rel (%p16) target = $region8
    $region5: #{tpu_custom_call.1} parent=1 // loop_body
      %s20 = ssub.s32 %s15, 1
      %s21 = ssub.s32 %s15, 2
      %s22 = sadd.s32 %s15, 1
      %s23 = ssub.s32 %s15, %s22
      %p24 = scmp.eq.s32.totalorder %s23, 0
      %s26 = sadd.s32 %s25, 1
      %s27 = scalar_select %p24, %s25, %s26
      %p30 = pneg %p24
      %p31 = scmp.eq.s32.totalorder %s15, 1
      %p32 = por %p30, %p31
      %p33 = scmp.ne.s32.totalorder %s25, %s28
      %p34 = scmp.eq.s32.totalorder %s15, 0
      %p35 = por %p33, %p34
      %p36 = scmp.ne.s32.totalorder %s25, %s28
      %p37 = scmp.eq.s32.totalorder %s20, 1
      %p38 = por %p36, %p37
      %p39 = scmp.ne.s32.totalorder %s28, %s29
      %p40 = scmp.eq.s32.totalorder %s20, 0
      %p41 = por %p39, %p40
      %p42 = scmp.ne.s32.totalorder %s28, %s29
      %p43 = scmp.eq.s32.totalorder %s21, 1
      %p44 = por %p42, %p43
      %p46 = scmp.ne.s32.totalorder %s29, %s45
      %p47 = scmp.eq.s32.totalorder %s21, 0
      %p48 = por %p46, %p47
      %s50 = sadd.s32 %s49, 1
      %p53 = scmp.eq.s32.totalorder %s15, 1
      %p54 = scmp.ne.s32.totalorder %s49, %s51
      %p55 = scmp.eq.s32.totalorder %s15, 0
      %p56 = por %p54, %p55
      %p57 = scmp.ne.s32.totalorder %s49, %s51
      %p58 = scmp.eq.s32.totalorder %s20, 1
      %p59 = por %p57, %p58
      %p60 = scmp.ne.s32.totalorder %s51, %s52
      %p61 = scmp.eq.s32.totalorder %s20, 0
      %p62 = por %p60, %p61
      %p63 = scmp.ne.s32.totalorder %s51, %s52
      %p64 = scmp.eq.s32.totalorder %s21, 1
      %p65 = por %p63, %p64
      %p67 = scmp.ne.s32.totalorder %s52, %s66
      %p68 = scmp.eq.s32.totalorder %s21, 0
      %p69 = por %p67, %p68
      %s70 = ssub.s32 %s15, %s22
      %p71 = scmp.eq.s32.totalorder %s70, 0
      %s73 = sadd.s32 %s72, 1
      %s74 = scalar_select %p71, %s72, %s73
      %p77 = pneg %p71
      %p78 = scmp.eq.s32.totalorder %s15, 1
      %p79 = por %p77, %p78
      %p80 = scmp.ne.s32.totalorder %s72, %s75
      %p81 = scmp.eq.s32.totalorder %s15, 0
      %p82 = por %p80, %p81
      %p83 = scmp.ne.s32.totalorder %s72, %s75
      %p84 = scmp.eq.s32.totalorder %s20, 1
      %p85 = por %p83, %p84
      %p86 = scmp.ne.s32.totalorder %s75, %s76
      %p87 = scmp.eq.s32.totalorder %s20, 0
      %p88 = por %p86, %p87
      %p89 = scmp.ne.s32.totalorder %s75, %s76
      %p90 = scmp.eq.s32.totalorder %s21, 1
      %p91 = por %p89, %p90
      %p93 = scmp.ne.s32.totalorder %s76, %s92
      %p94 = scmp.eq.s32.totalorder %s21, 0
      %p95 = por %p93, %p94
      %p96 = scmp.le.s32.totalorder 1, %s15
      %p97 = scmp.lt.s32.totalorder %s15, 3
      %p98 = pnand %p96, %p97
      %p99 = pneg %p98
      // Predicated region
      $region9: #{tpu_custom_call.1} parent=5 // pred_check
        _
      $region10: #{tpu_custom_call.1} parent=5 // pred_check_branch
        %101 = sbr.rel (%p98) target = $region12
      $region11: #{tpu_custom_call.1} parent=5 // pred_region
        %s102 = ssub.s32 %s15, 1
        // Predicated region
        $region13: #{tpu_custom_call.1} parent=11 // pred_check
          %p103 = pneg %p62
        $region14: #{tpu_custom_call.1} parent=11 // pred_check_branch
          %105 = sbr.rel (%p103) target = $region16
        $region15: #{tpu_custom_call.1} parent=11 // pred_region
          %107 = vsyncadd [#allocation7], 0
          %s108 = sshll.u32 %s1, 4
          %s109 = int_to_ptr.hbm [resolvable:$true] %s108
          %s110 = sshll.u32 [#allocation6], 4
          %s111 = int_to_ptr.vmem [resolvable:$true] %s110
          %116 = dma.hbm_to_vmem [thread:$0]  %s109, 2048, %s111, [#allocation7], 256, 256, 16
        $region16: #{tpu_custom_call.1} parent=11 // pred_fallthru
          _
      $region12: #{tpu_custom_call.1} parent=5 // pred_fallthru
        _
      %p117 = scmp.lt.s32.totalorder %s15, 2
      // Predicated region
      $region17: #{tpu_custom_call.1} parent=5 // pred_check
        %p118 = pneg %p117
      $region18: #{tpu_custom_call.1} parent=5 // pred_check_branch
        %120 = sbr.rel (%p118) target = $region20
      $region19: #{tpu_custom_call.1} parent=5 // pred_region
        // Predicated region
        $region21: #{tpu_custom_call.1} parent=19 // pred_check
          %p121 = pneg %p35
        $region22: #{tpu_custom_call.1} parent=19 // pred_check_branch
          %123 = sbr.rel (%p121) target = $region24
        $region23: #{tpu_custom_call.1} parent=19 // pred_region
          %s124 = sand.u32 %s25, 1
          %s125 = scalar_lea.sflag [#allocation4], %s124
          %s126 = sand.u32 %s25, 1
          %s127 = smul.addr %s126, 32
          %s128 = scalar_lea.vmem [#allocation3], %s127
          %s129 = smul.u32 4, %s15
          %131 = vsyncadd %s125, 0
          %s132 = smul.addr %s129, 8
          %s133 = scalar_lea.hbm %s0, %s132
          %s134 = sshll.u32 %s133, 4
          %s135 = int_to_ptr.hbm [resolvable:$true] %s134
          %s136 = sshll.u32 %s128, 4
          %s137 = int_to_ptr.vmem [resolvable:$true] %s136
          %142 = dma.hbm_to_vmem [thread:$0]  %s135, 512, %s137, %s125, 128, 128, 8
        $region24: #{tpu_custom_call.1} parent=19 // pred_fallthru
          _
      $region20: #{tpu_custom_call.1} parent=5 // pred_fallthru
        _
      %p143 = scmp.le.s32.totalorder 1, %s15
      %p144 = scmp.lt.s32.totalorder %s15, 3
      %p145 = pnand %p143, %p144
      %p146 = pneg %p145
      // Predicated region
      $region25: #{tpu_custom_call.1} parent=5 // pred_check
        _
      $region26: #{tpu_custom_call.1} parent=5 // pred_check_branch
        %148 = sbr.rel (%p145) target = $region28
      $region27: #{tpu_custom_call.1} parent=5 // pred_region
        %s149 = ssub.s32 %s15, 1
        %s150 = sand.u32 %s28, 1
        %s151 = scalar_lea.sflag [#allocation4], %s150
        %s152 = sand.u32 %s28, 1
        %s153 = smul.addr %s152, 32
        %s154 = scalar_lea.vmem [#allocation3], %s153
        // Predicated region
        $region29: #{tpu_custom_call.1} parent=27 // pred_check
          %p155 = pneg %p41
        $region30: #{tpu_custom_call.1} parent=27 // pred_check_branch
          %157 = sbr.rel (%p155) target = $region32
        $region31: #{tpu_custom_call.1} parent=27 // pred_region
          %159 = dma.done %s151, 512
        $region32: #{tpu_custom_call.1} parent=27 // pred_fallthru
          _
        // Predicated region
        $region33: #{tpu_custom_call.1} parent=27 // pred_check
          %p160 = pneg %p62
        $region34: #{tpu_custom_call.1} parent=27 // pred_check_branch
          %162 = sbr.rel (%p160) target = $region36
        $region35: #{tpu_custom_call.1} parent=27 // pred_region
          %164 = dma.done [#allocation7], 2048
        $region36: #{tpu_custom_call.1} parent=27 // pred_fallthru
          _
        %s165 = sand.u32 %s28, 1
        %s166 = scalar_lea.sflag [#allocation4], %s165
        %s167 = sand.u32 %s28, 1
        %s168 = smul.addr %s167, 32
        %s169 = scalar_lea.vmem [#allocation3], %s168
        %p170 = pneg %p41
        %p171 = pneg %p38
        %p172 = pneg %p62
        %p173 = pneg %p59
        %p174 = pneg %p88
        %p175 = pneg %p85
        %s176 = sand.u32 %s75, 1
        %s177 = scalar_lea.sflag [#allocation5], %s176
        %s178 = sand.u32 %s75, 1
        %s179 = smul.addr %s178, 128
        %s180 = scalar_lea.vmem [#allocation8], %s179
        %s181 = smul.u32 4, %s20
        %s182 = smul.u32 4, %s20
        %v183 = vld [vmem:[%s154] sm:$0xff]
        %v184 = vld [vmem:[%s154 + $0x8] sm:$0xff]
        %v185 = vld [vmem:[%s154 + $0x10] sm:$0xff]
        %v186 = vld [vmem:[%s154 + $0x18] sm:$0xff]
        %v187 = vld [vmem:[#allocation6] sm:$0xff]
        %v188 = vld [vmem:[#allocation6 + $0x8] sm:$0xff]
        %v189 = vld [vmem:[#allocation6 + $0x10] sm:$0xff]
        %v190 = vld [vmem:[#allocation6 + $0x18] sm:$0xff]
        %v191 = vld [vmem:[#allocation6 + $0x20] sm:$0xff]
        %v192 = vld [vmem:[#allocation6 + $0x28] sm:$0xff]
        %v193 = vld [vmem:[#allocation6 + $0x30] sm:$0xff]
        %v194 = vld [vmem:[#allocation6 + $0x38] sm:$0xff]
        %v195 = vld [vmem:[#allocation6 + $0x40] sm:$0xff]
        %v196 = vld [vmem:[#allocation6 + $0x48] sm:$0xff]
        %v197 = vld [vmem:[#allocation6 + $0x50] sm:$0xff]
        %v198 = vld [vmem:[#allocation6 + $0x58] sm:$0xff]
        %v199 = vld [vmem:[#allocation6 + $0x60] sm:$0xff]
        %v200 = vld [vmem:[#allocation6 + $0x68] sm:$0xff]
        %v201 = vld [vmem:[#allocation6 + $0x70] sm:$0xff]
        %v202 = vld [vmem:[#allocation6 + $0x78] sm:$0xff]
        %vm203 = vcmask 523264
        %v205 = vsel %vm203, %v183, 0
        %v208 = vsel %vm203, %v184, 0
        %v211 = vsel %vm203, %v185, 0
        %v214 = vsel %vm203, %v186, 0
        %216 = vmatpush.msra.mxu0 0.0
        %217 = vmatpush.msra.mxu0 0.0
        %218 = vmatpush.msra.mxu0 0.0
        %219 = vmatpush.msra.mxu0 0.0
        %220 = vmatpush.msra.mxu0 0.0
        %221 = vmatpush.msra.mxu0 0.0
        %222 = vmatpush.msra.mxu0 0.0
        %223 = vmatpush.msra.mxu0 0.0
        %224 = vmatpush.msra.mxu0 %v201
        %225 = vmatpush.msra.mxu0 %v199
        %226 = vmatpush.msra.mxu0 %v197
        %227 = vmatpush.msra.mxu0 %v195
        %228 = vmatpush.msra.mxu0 %v193
        %229 = vmatpush.msra.mxu0 %v191
        %230 = vmatpush.msra.mxu0 %v189
        %231 = vmatpush.msra.mxu0 %v187
        %232 = vmatmul.f32.gmra.mxu0 %v205
        %v233 = vpop.f32.mrf.mxu0
        %v234 = vadd.f32 0.0, %v233
        %235 = vmatmul.f32.gmra.mxu0 %v208
        %v236 = vpop.f32.mrf.mxu0
        %v237 = vadd.f32 0.0, %v236
        %238 = vmatmul.f32.gmra.mxu0 %v211
        %v239 = vpop.f32.mrf.mxu0
        %v240 = vadd.f32 0.0, %v239
        %241 = vmatmul.f32.gmra.mxu0 %v214
        %v242 = vpop.f32.mrf.mxu0
        %v243 = vadd.f32 0.0, %v242
        %244 = vdwg.mxu0
        %245 = vmatpush.msra.mxu0 0.0
        %246 = vmatpush.msra.mxu0 0.0
        %247 = vmatpush.msra.mxu0 0.0
        %248 = vmatpush.msra.mxu0 0.0
        %249 = vmatpush.msra.mxu0 0.0
        %250 = vmatpush.msra.mxu0 0.0
        %251 = vmatpush.msra.mxu0 0.0
        %252 = vmatpush.msra.mxu0 0.0
        %253 = vmatpush.msra.mxu0 %v202
        %254 = vmatpush.msra.mxu0 %v200
        %255 = vmatpush.msra.mxu0 %v198
        %256 = vmatpush.msra.mxu0 %v196
        %257 = vmatpush.msra.mxu0 %v194
        %258 = vmatpush.msra.mxu0 %v192
        %259 = vmatpush.msra.mxu0 %v190
        %260 = vmatpush.msra.mxu0 %v188
        %261 = vmatmul.f32.gmra.mxu0 %v205
        %v262 = vpop.f32.mrf.mxu0
        %v263 = vadd.f32 0.0, %v262
        %264 = vmatmul.f32.gmra.mxu0 %v208
        %v265 = vpop.f32.mrf.mxu0
        %v266 = vadd.f32 0.0, %v265
        %267 = vmatmul.f32.gmra.mxu0 %v211
        %v268 = vpop.f32.mrf.mxu0
        %v269 = vadd.f32 0.0, %v268
        %270 = vmatmul.f32.gmra.mxu0 %v214
        %v271 = vpop.f32.mrf.mxu0
        %v272 = vadd.f32 0.0, %v271
        %273 = vdwg.mxu0
        %274 = vst [vmem:[#allocation2] sm:$0xff] %v234
        %275 = vst [vmem:[#allocation2 + $0x8] sm:$0xff] %v263
        %276 = vst [vmem:[#allocation2 + $0x10] sm:$0xff] %v237
        %277 = vst [vmem:[#allocation2 + $0x18] sm:$0xff] %v266
        %278 = vst [vmem:[#allocation2 + $0x20] sm:$0xff] %v240
        %279 = vst [vmem:[#allocation2 + $0x28] sm:$0xff] %v269
        %280 = vst [vmem:[#allocation2 + $0x30] sm:$0xff] %v243
        %281 = vst [vmem:[#allocation2 + $0x38] sm:$0xff] %v272
        %v282 = vld [vmem:[#allocation2] ss:$8 sm:$0x3]
        %s283 = scalar_lea.vmem [#allocation2], 16
        %v284 = vld [vmem:[%s283] ss:$8 sm:$0x3]
        %s285 = scalar_lea.vmem [#allocation2], 32
        %v286 = vld [vmem:[%s285] ss:$8 sm:$0x3]
        %s287 = scalar_lea.vmem [#allocation2], 48
        %v288 = vld [vmem:[%s287] ss:$8 sm:$0x3]
        %v293 = vperm.slane %v282, 0
        %v294 = vperm.slane %v282, 1
        %v295 = vperm.slane %v284, 0
        %v296 = vperm.slane %v284, 1
        %v297 = vperm.slane %v286, 0
        %v298 = vperm.slane %v286, 1
        %v299 = vperm.slane %v288, 0
        %v300 = vperm.slane %v288, 1
        %309 = vst [vmem:[%s180] sm:$0x3] %v293
        %310 = vst [vmem:[%s180 + $0x8] sm:$0x3] %v294
        %311 = vst [vmem:[%s180 + $0x20] sm:$0x3] %v295
        %312 = vst [vmem:[%s180 + $0x28] sm:$0x3] %v296
        %313 = vst [vmem:[%s180 + $0x40] sm:$0x3] %v297
        %314 = vst [vmem:[%s180 + $0x48] sm:$0x3] %v298
        %315 = vst [vmem:[%s180 + $0x60] sm:$0x3] %v299
        %316 = vst [vmem:[%s180 + $0x68] sm:$0x3] %v300
        %s317 = scalar_lea.vmem [#allocation2], 1
        %v318 = vld [vmem:[%s317] ss:$8 sm:$0x3]
        %s319 = scalar_lea.vmem [#allocation2], 17
        %v320 = vld [vmem:[%s319] ss:$8 sm:$0x3]
        %s321 = scalar_lea.vmem [#allocation2], 33
        %v322 = vld [vmem:[%s321] ss:$8 sm:$0x3]
        %s323 = scalar_lea.vmem [#allocation2], 49
        %v324 = vld [vmem:[%s323] ss:$8 sm:$0x3]
        %v329 = vperm.slane %v318, 0
        %v330 = vperm.slane %v318, 1
        %v331 = vperm.slane %v320, 0
        %v332 = vperm.slane %v320, 1
        %v333 = vperm.slane %v322, 0
        %v334 = vperm.slane %v322, 1
        %v335 = vperm.slane %v324, 0
        %v336 = vperm.slane %v324, 1
        %345 = vst [vmem:[%s180] sm:$0xc] %v329
        %346 = vst [vmem:[%s180 + $0x8] sm:$0xc] %v330
        %347 = vst [vmem:[%s180 + $0x20] sm:$0xc] %v331
        %348 = vst [vmem:[%s180 + $0x28] sm:$0xc] %v332
        %349 = vst [vmem:[%s180 + $0x40] sm:$0xc] %v333
        %350 = vst [vmem:[%s180 + $0x48] sm:$0xc] %v334
        %351 = vst [vmem:[%s180 + $0x60] sm:$0xc] %v335
        %352 = vst [vmem:[%s180 + $0x68] sm:$0xc] %v336
        %s353 = scalar_lea.vmem [#allocation2], 2
        %v354 = vld [vmem:[%s353] ss:$8 sm:$0x3]
        %s355 = scalar_lea.vmem [#allocation2], 18
        %v356 = vld [vmem:[%s355] ss:$8 sm:$0x3]
        %s357 = scalar_lea.vmem [#allocation2], 34
        %v358 = vld [vmem:[%s357] ss:$8 sm:$0x3]
        %s359 = scalar_lea.vmem [#allocation2], 50
        %v360 = vld [vmem:[%s359] ss:$8 sm:$0x3]
        %v365 = vperm.slane %v354, 0
        %v366 = vperm.slane %v354, 1
        %v367 = vperm.slane %v356, 0
        %v368 = vperm.slane %v356, 1
        %v369 = vperm.slane %v358, 0
        %v370 = vperm.slane %v358, 1
        %v371 = vperm.slane %v360, 0
        %v372 = vperm.slane %v360, 1
        %381 = vst [vmem:[%s180] sm:$0x30] %v365
        %382 = vst [vmem:[%s180 + $0x8] sm:$0x30] %v366
        %383 = vst [vmem:[%s180 + $0x20] sm:$0x30] %v367
        %384 = vst [vmem:[%s180 + $0x28] sm:$0x30] %v368
        %385 = vst [vmem:[%s180 + $0x40] sm:$0x30] %v369
        %386 = vst [vmem:[%s180 + $0x48] sm:$0x30] %v370
        %387 = vst [vmem:[%s180 + $0x60] sm:$0x30] %v371
        %388 = vst [vmem:[%s180 + $0x68] sm:$0x30] %v372
        %s389 = scalar_lea.vmem [#allocation2], 3
        %v390 = vld [vmem:[%s389] ss:$8 sm:$0x3]
        %s391 = scalar_lea.vmem [#allocation2], 19
        %v392 = vld [vmem:[%s391] ss:$8 sm:$0x3]
        %s393 = scalar_lea.vmem [#allocation2], 35
        %v394 = vld [vmem:[%s393] ss:$8 sm:$0x3]
        %s395 = scalar_lea.vmem [#allocation2], 51
        %v396 = vld [vmem:[%s395] ss:$8 sm:$0x3]
        %v401 = vperm.slane %v390, 0
        %v402 = vperm.slane %v390, 1
        %v403 = vperm.slane %v392, 0
        %v404 = vperm.slane %v392, 1
        %v405 = vperm.slane %v394, 0
        %v406 = vperm.slane %v394, 1
        %v407 = vperm.slane %v396, 0
        %v408 = vperm.slane %v396, 1
        %417 = vst [vmem:[%s180] sm:$0xc0] %v401
        %418 = vst [vmem:[%s180 + $0x8] sm:$0xc0] %v402
        %419 = vst [vmem:[%s180 + $0x20] sm:$0xc0] %v403
        %420 = vst [vmem:[%s180 + $0x28] sm:$0xc0] %v404
        %421 = vst [vmem:[%s180 + $0x40] sm:$0xc0] %v405
        %422 = vst [vmem:[%s180 + $0x48] sm:$0xc0] %v406
        %423 = vst [vmem:[%s180 + $0x60] sm:$0xc0] %v407
        %424 = vst [vmem:[%s180 + $0x68] sm:$0xc0] %v408
        %s425 = scalar_lea.vmem [#allocation2], 4
        %v426 = vld [vmem:[%s425] ss:$8 sm:$0x3]
        %s427 = scalar_lea.vmem [#allocation2], 20
        %v428 = vld [vmem:[%s427] ss:$8 sm:$0x3]
        %s429 = scalar_lea.vmem [#allocation2], 36
        %v430 = vld [vmem:[%s429] ss:$8 sm:$0x3]
        %s431 = scalar_lea.vmem [#allocation2], 52
        %v432 = vld [vmem:[%s431] ss:$8 sm:$0x3]
        %v437 = vperm.slane %v426, 0
        %v438 = vperm.slane %v426, 1
        %v439 = vperm.slane %v428, 0
        %v440 = vperm.slane %v428, 1
        %v441 = vperm.slane %v430, 0
        %v442 = vperm.slane %v430, 1
        %v443 = vperm.slane %v432, 0
        %v444 = vperm.slane %v432, 1
        %453 = vst [vmem:[%s180 + $0x10] sm:$0x3] %v437
        %454 = vst [vmem:[%s180 + $0x18] sm:$0x3] %v438
        %455 = vst [vmem:[%s180 + $0x30] sm:$0x3] %v439
        %456 = vst [vmem:[%s180 + $0x38] sm:$0x3] %v440
        %457 = vst [vmem:[%s180 + $0x50] sm:$0x3] %v441
        %458 = vst [vmem:[%s180 + $0x58] sm:$0x3] %v442
        %459 = vst [vmem:[%s180 + $0x70] sm:$0x3] %v443
        %460 = vst [vmem:[%s180 + $0x78] sm:$0x3] %v444
        %s461 = scalar_lea.vmem [#allocation2], 5
        %v462 = vld [vmem:[%s461] ss:$8 sm:$0x3]
        %s463 = scalar_lea.vmem [#allocation2], 21
        %v464 = vld [vmem:[%s463] ss:$8 sm:$0x3]
        %s465 = scalar_lea.vmem [#allocation2], 37
        %v466 = vld [vmem:[%s465] ss:$8 sm:$0x3]
        %s467 = scalar_lea.vmem [#allocation2], 53
        %v468 = vld [vmem:[%s467] ss:$8 sm:$0x3]
        %v473 = vperm.slane %v462, 0
        %v474 = vperm.slane %v462, 1
        %v475 = vperm.slane %v464, 0
        %v476 = vperm.slane %v464, 1
        %v477 = vperm.slane %v466, 0
        %v478 = vperm.slane %v466, 1
        %v479 = vperm.slane %v468, 0
        %v480 = vperm.slane %v468, 1
        %489 = vst [vmem:[%s180 + $0x10] sm:$0xc] %v473
        %490 = vst [vmem:[%s180 + $0x18] sm:$0xc] %v474
        %491 = vst [vmem:[%s180 + $0x30] sm:$0xc] %v475
        %492 = vst [vmem:[%s180 + $0x38] sm:$0xc] %v476
        %493 = vst [vmem:[%s180 + $0x50] sm:$0xc] %v477
        %494 = vst [vmem:[%s180 + $0x58] sm:$0xc] %v478
        %495 = vst [vmem:[%s180 + $0x70] sm:$0xc] %v479
        %496 = vst [vmem:[%s180 + $0x78] sm:$0xc] %v480
        %s497 = scalar_lea.vmem [#allocation2], 6
        %v498 = vld [vmem:[%s497] ss:$8 sm:$0x3]
        %s499 = scalar_lea.vmem [#allocation2], 22
        %v500 = vld [vmem:[%s499] ss:$8 sm:$0x3]
        %s501 = scalar_lea.vmem [#allocation2], 38
        %v502 = vld [vmem:[%s501] ss:$8 sm:$0x3]
        %s503 = scalar_lea.vmem [#allocation2], 54
        %v504 = vld [vmem:[%s503] ss:$8 sm:$0x3]
        %v509 = vperm.slane %v498, 0
        %v510 = vperm.slane %v498, 1
        %v511 = vperm.slane %v500, 0
        %v512 = vperm.slane %v500, 1
        %v513 = vperm.slane %v502, 0
        %v514 = vperm.slane %v502, 1
        %v515 = vperm.slane %v504, 0
        %v516 = vperm.slane %v504, 1
        %525 = vst [vmem:[%s180 + $0x10] sm:$0x30] %v509
        %526 = vst [vmem:[%s180 + $0x18] sm:$0x30] %v510
        %527 = vst [vmem:[%s180 + $0x30] sm:$0x30] %v511
        %528 = vst [vmem:[%s180 + $0x38] sm:$0x30] %v512
        %529 = vst [vmem:[%s180 + $0x50] sm:$0x30] %v513
        %530 = vst [vmem:[%s180 + $0x58] sm:$0x30] %v514
        %531 = vst [vmem:[%s180 + $0x70] sm:$0x30] %v515
        %532 = vst [vmem:[%s180 + $0x78] sm:$0x30] %v516
        %s533 = scalar_lea.vmem [#allocation2], 7
        %v534 = vld [vmem:[%s533] ss:$8 sm:$0x3]
        %s535 = scalar_lea.vmem [#allocation2], 23
        %v536 = vld [vmem:[%s535] ss:$8 sm:$0x3]
        %s537 = scalar_lea.vmem [#allocation2], 39
        %v538 = vld [vmem:[%s537] ss:$8 sm:$0x3]
        %s539 = scalar_lea.vmem [#allocation2], 55
        %v540 = vld [vmem:[%s539] ss:$8 sm:$0x3]
        %v545 = vperm.slane %v534, 0
        %v546 = vperm.slane %v534, 1
        %v547 = vperm.slane %v536, 0
        %v548 = vperm.slane %v536, 1
        %v549 = vperm.slane %v538, 0
        %v550 = vperm.slane %v538, 1
        %v551 = vperm.slane %v540, 0
        %v552 = vperm.slane %v540, 1
        %561 = vst [vmem:[%s180 + $0x10] sm:$0xc0] %v545
        %562 = vst [vmem:[%s180 + $0x18] sm:$0xc0] %v546
        %563 = vst [vmem:[%s180 + $0x30] sm:$0xc0] %v547
        %564 = vst [vmem:[%s180 + $0x38] sm:$0xc0] %v548
        %565 = vst [vmem:[%s180 + $0x50] sm:$0xc0] %v549
        %566 = vst [vmem:[%s180 + $0x58] sm:$0xc0] %v550
        %567 = vst [vmem:[%s180 + $0x70] sm:$0xc0] %v551
        %568 = vst [vmem:[%s180 + $0x78] sm:$0xc0] %v552
        %s569 = sand.u32 %s75, 1
        %s570 = scalar_lea.sflag [#allocation5], %s569
        %s571 = sand.u32 %s75, 1
        %s572 = smul.addr %s571, 128
        %s573 = scalar_lea.vmem [#allocation8], %s572
        // Predicated region
        $region37: #{tpu_custom_call.1} parent=27 // pred_check
          %p574 = pneg %p85
        $region38: #{tpu_custom_call.1} parent=27 // pred_check_branch
          %576 = sbr.rel (%p574) target = $region40
        $region39: #{tpu_custom_call.1} parent=27 // pred_region
          %s577 = smul.u32 4, %s20
          %579 = vsyncadd %s570, 0
          %s580 = smul.addr %s577, 4
          %s581 = smul.addr %s580, 8
          %s582 = scalar_lea.hbm %s2, %s581
          %s583 = sshll.u32 %s573, 4
          %s584 = int_to_ptr.vmem [resolvable:$true] %s583
          %s585 = sshll.u32 %s582, 4
          %s586 = int_to_ptr.hbm [resolvable:$true] %s585
          %591 = dma.vmem_to_hbm [thread:$0]  %s584, 2048, %s586, %s570, 256, 256, 16
        $region40: #{tpu_custom_call.1} parent=27 // pred_fallthru
          _
      $region28: #{tpu_custom_call.1} parent=5 // pred_fallthru
        _
      %p592 = scmp.le.s32.totalorder 2, %s15
      // Predicated region
      $region41: #{tpu_custom_call.1} parent=5 // pred_check
        %p593 = pneg %p592
      $region42: #{tpu_custom_call.1} parent=5 // pred_check_branch
        %595 = sbr.rel (%p593) target = $region44
      $region43: #{tpu_custom_call.1} parent=5 // pred_region
        %s596 = ssub.s32 %s15, 2
        // Predicated region
        $region45: #{tpu_custom_call.1} parent=43 // pred_check
          %p597 = pneg %p91
        $region46: #{tpu_custom_call.1} parent=43 // pred_check_branch
          %599 = sbr.rel (%p597) target = $region48
        $region47: #{tpu_custom_call.1} parent=43 // pred_region
          %s600 = sand.u32 %s76, 1
          %s601 = scalar_lea.sflag [#allocation5], %s600
          %s602 = sand.u32 %s76, 1
          %s603 = smul.addr %s602, 128
          %s604 = scalar_lea.vmem [#allocation8], %s603
          %606 = dma.done %s601, 2048
        $region48: #{tpu_custom_call.1} parent=43 // pred_fallthru
          _
      $region44: #{tpu_custom_call.1} parent=5 // pred_fallthru
        _
    $region6: #{tpu_custom_call.1} parent=1 // loop_footer
      %s19 = sadd.s32 1, %s15
    $region7: #{tpu_custom_call.1} parent=1 // loop_footer_branch
      %14 = sbr.rel target = $region3
    $region8: #{tpu_custom_call.1} parent=1 // loop_exit
      _
    %607 = vsyncpa [#allocation4], 1
    %s608 = scalar_lea.sflag [#allocation4], 1
    %609 = vsyncpa %s608, 1
    %610 = vsyncpa [#allocation7], 1
    %611 = vsyncpa [#allocation5], 1
    %s612 = scalar_lea.sflag [#allocation5], 1
    %613 = vsyncpa %s612, 1

</llo_original>
